<compile_context>
chip_gen: v7x
topology: tpu7x:2x2x1
jax: 0.10.0
libtpu: 0.0.40
codegen_flags: <defaults>
</compile_context>

<pallas_src>
import jax
import jax.numpy as jnp
from jax.experimental import pallas as pl
from jax.experimental.pallas import tpu as pltpu


def _se_kernel(x_ref, w1t_ref, b1_ref, w2t_ref, b2_ref, o_ref):
    """One grid step gates Bt samples; x block is (Bt, C, HW)."""
    x = x_ref[...]

    # --- squeeze: spatial sum, accumulated in f32.  (1/HW is folded into the
    # fc1 weight on the host, so no per-step VPU multiply is needed.) ---
    pooled = jnp.sum(x.astype(jnp.float32), axis=2)                   # (Bt, C)

    # --- excitation: fc1 (1x1 conv) + ReLU ---
    # TODO(synk): Dropout(0.3) is identity here (eval-mode); train-mode
    # dropout would need pltpu.prng_* based masking.
    h = jnp.dot(pooled, w1t_ref[...],
                preferred_element_type=jnp.float32) + b1_ref[...]     # (Bt, Cr)
    h = jnp.maximum(h, 0.0)

    # --- excitation: fc2 (1x1 conv) + sigmoid ---
    s = jnp.dot(h, w2t_ref[...],
                preferred_element_type=jnp.float32) + b2_ref[...]     # (Bt, C)
    s = jax.nn.sigmoid(s)

    # --- scale: broadcast the per-channel gate over spatial positions.
    # Done in the input's native dtype so the bandwidth-bound pass never
    # materializes a full-block f32 copy of x. ---
    o_ref[...] = (x * s.astype(x.dtype)[:, :, None]).astype(o_ref.dtype)


def _vmem_budget():
    """(target_block_bytes, vmem_limit_ceiling, prefer_even_grid)."""
    try:
        phys = int(pltpu.get_tpu_info().vmem_capacity_bytes)
    except Exception:
        phys = 64 << 20                      # conservative fallback (v7x-size)
    if phys <= (64 << 20):                   # v7x-class TC: 64 MiB, 2 TCs/chip
        return (8 << 20), (48 << 20), True
    return (16 << 20), (96 << 20), False     # v5e / v6e: 128 MiB physical


_TARGET_BLOCK_BYTES, _VMEM_CEILING, _PREFER_EVEN_GRID = _vmem_budget()


def _padded_f32_bytes(rows, cols):
    """VMEM footprint of a small f32 (rows, cols) block after (8,128) tiling."""
    return (pl.cdiv(rows, 8) * 8) * (pl.cdiv(cols, 128) * 128) * 4


def _pick_bt(batch, bt_cap, prefer_even_grid):
    """Samples per grid step.  Sized purely from the block/VMEM budget; only
    require grid >= 2 when the batch allows (double-buffering and, on v7x,
    both TensorCores); best-effort even grid on v7x."""
    bt = int(max(1, min(bt_cap, batch)))
    if batch >= 2:
        bt = min(bt, pl.cdiv(batch, 2))          # grid >= 2
    if prefer_even_grid and batch >= 2 and bt > 1:
        # Best effort: even grid so both v7x TensorCores get equal work.
        # Never shrink the block below half the target.
        for cand in range(bt, max(1, bt // 2) - 1, -1):
            if pl.cdiv(batch, cand) % 2 == 0:
                bt = cand
                break
    return bt


@jax.jit
def se_layer(x, w1, b1, w2, b2):
    """x: (B, C, H, W); w1: (Cr, C); b1: (Cr, 1); w2: (C, Cr); b2: (C, 1)."""
    B, C, H, W = x.shape
    Cr = w1.shape[0]
    HW = H * W
    itemsize = x.dtype.itemsize

    # Host-side prep: pre-transposed weights (1/HW folded into fc1 weight),
    # lane-major biases.  Tiny, one-time.
    w1t = (w1.T * jnp.float32(1.0 / HW)).astype(jnp.float32)   # (C, Cr)
    w2t = w2.T.astype(jnp.float32)                             # (Cr, C)
    b1r = b1.reshape(1, Cr).astype(jnp.float32)
    b2r = b2.reshape(1, C).astype(jnp.float32)

    # --- block sizing: generation-aware VMEM budget ---
    sample_bytes = C * HW * itemsize
    sample_f32_bytes = C * HW * 4
    # 4 = double-buffered input + output blocks; + one f32 temp for the
    # spatial reduction (conservative).
    per_sample_vmem = 4 * sample_bytes + sample_f32_bytes
    weight_bytes = 2 * (_padded_f32_bytes(C, Cr) + _padded_f32_bytes(1, Cr)
                        + _padded_f32_bytes(Cr, C) + _padded_f32_bytes(1, C))
    headroom = 2 << 20

    bt_target = max(1, _TARGET_BLOCK_BYTES // max(sample_bytes, 1))
    bt_vmem = max(1, (_VMEM_CEILING - weight_bytes - headroom)
                  // max(per_sample_vmem, 1))
    Bt = _pick_bt(B, min(bt_target, bt_vmem), _PREFER_EVEN_GRID)
    grid = pl.cdiv(B, Bt)

    need = Bt * per_sample_vmem + weight_bytes + headroom
    vmem_limit = int(max(16 << 20, min(need, _VMEM_CEILING)))
    # TODO(synk): a single sample larger than the VMEM budget (huge C*HW)
    # needs a two-phase pool-then-scale kernel tiled over HW; not implemented.

    x2 = x.reshape(B, C, HW)                   # free relayout (no transpose)
    blk = (Bt, C, HW)

    cost = pl.CostEstimate(
        flops=int(4 * B * C * Cr + 2 * B * C * HW),
        transcendentals=int(B * C),
        bytes_accessed=int(2 * B * C * HW * itemsize + weight_bytes // 2),
    )

    out = pl.pallas_call(
        _se_kernel,
        out_shape=jax.ShapeDtypeStruct((B, C, HW), x.dtype),
        grid_spec=pltpu.PrefetchScalarGridSpec(
            num_scalar_prefetch=0,
            grid=(grid,),
            in_specs=[
                pl.BlockSpec(blk, lambda b: (b, 0, 0)),
                # Grid-invariant constants (pl.Buffered(1) would save their
                # double-buffer copy; omitted for portability — cost is KiBs).
                pl.BlockSpec((C, Cr), lambda b: (0, 0)),
                pl.BlockSpec((1, Cr), lambda b: (0, 0)),
                pl.BlockSpec((Cr, C), lambda b: (0, 0)),
                pl.BlockSpec((1, C), lambda b: (0, 0)),
            ],
            out_specs=pl.BlockSpec(blk, lambda b: (b, 0, 0)),
        ),
        compiler_params=pltpu.CompilerParams(
            dimension_semantics=("parallel",),
            vmem_limit_bytes=vmem_limit),
        cost_estimate=cost,
    )(x2, w1t, b1r, w2t, b2r)

    return out.reshape(B, C, H, W)


def se_layer_reference(x, w1, b1, w2, b2):
    """Pure-JAX reference mirroring the PyTorch forward (eval mode)."""
    pooled = jnp.mean(x, axis=(2, 3))                                  # (B, C)
    h = jnp.maximum(pooled @ w1.T + b1[:, 0], 0.0)                     # (B, Cr)
    s = jax.nn.sigmoid(h @ w2.T + b2[:, 0])                            # (B, C)
    return x * s[:, :, None, None]


if __name__ == "__main__":
    # channels must be a multiple of reduction=16 so channels // reduction >= 1
    B, C, H, W = 2, 32, 16, 16
    reduction = 16
    Cr = C // reduction

    key = jax.random.PRNGKey(0)
    kx, kw1, kb1, kw2, kb2 = jax.random.split(key, 5)

    x = jax.random.normal(kx, (B, C, H, W), dtype=jnp.float32)
    # Deterministic synthetic parameters (shapes match nn.Conv2d(k=1) weights).
    w1 = jax.random.normal(kw1, (Cr, C), dtype=jnp.float32) * 0.1
    b1 = jax.random.normal(kb1, (Cr, 1), dtype=jnp.float32) * 0.1
    w2 = jax.random.normal(kw2, (C, Cr), dtype=jnp.float32) * 0.1
    b2 = jax.random.normal(kb2, (C, 1), dtype=jnp.float32) * 0.1

    out = se_layer(x, w1, b1, w2, b2)
    out = jax.block_until_ready(out)

    ref = se_layer_reference(x, w1, b1, w2, b2)
    assert out.shape == (B, C, H, W)
    assert jnp.allclose(out, ref, atol=1e-5, rtol=1e-5), "mismatch vs reference"

    print("KERNEL_OK")
</pallas_src>

<mosaic_0001>
module attributes {stable_mosaic.version = 11 : i64} {
  func.func @_se_kernel(%arg0: i32, %arg1: memref<1x32x256xf32, #tpu.memory_space<vmem>>, %arg2: memref<32x2xf32, #tpu.memory_space<vmem>>, %arg3: memref<1x2xf32, #tpu.memory_space<vmem>>, %arg4: memref<2x32xf32, #tpu.memory_space<vmem>>, %arg5: memref<1x32xf32, #tpu.memory_space<vmem>>, %arg6: memref<1x32x256xf32, #tpu.memory_space<vmem>>) attributes {dimension_semantics = [#tpu.dimension_semantics<parallel>], iteration_bounds = array<i64: 2>, scalar_prefetch = 0 : i64, scratch_operands = 0 : i64, tpu.core_type = #tpu.core_type<tc>, window_params = [{transform_indices = @transform_0, window_bounds = array<i64: 1, 32, 256>}, {pipeline_mode = #tpu.pipeline_mode<synchronous>, transform_indices = @transform_1, window_bounds = array<i64: 32, 2>}, {pipeline_mode = #tpu.pipeline_mode<synchronous>, transform_indices = @transform_2, window_bounds = array<i64: 1, 2>}, {pipeline_mode = #tpu.pipeline_mode<synchronous>, transform_indices = @transform_3, window_bounds = array<i64: 2, 32>}, {pipeline_mode = #tpu.pipeline_mode<synchronous>, transform_indices = @transform_4, window_bounds = array<i64: 1, 32>}, {transform_indices = @transform_5, window_bounds = array<i64: 1, 32, 256>}]} {
    %c0 = arith.constant 0 : index
    %c0_0 = arith.constant 0 : index
    %c0_1 = arith.constant 0 : index
    %0 = vector.load %arg1[%c0, %c0_0, %c0_1] : memref<1x32x256xf32, #tpu.memory_space<vmem>>, vector<1x32x256xf32>
    %cst = arith.constant dense<0.000000e+00> : vector<1x32xf32>
    %1 = vector.multi_reduction <add>, %0, %cst [2] : vector<1x32x256xf32> to vector<1x32xf32>
    %c0_2 = arith.constant 0 : index
    %c0_3 = arith.constant 0 : index
    %2 = vector.load %arg2[%c0_2, %c0_3] : memref<32x2xf32, #tpu.memory_space<vmem>>, vector<32x2xf32>
    %cst_4 = arith.constant dense<0.000000e+00> : vector<1x2xf32>
    %3 = tpu.matmul %1, %2, %cst_4 {dimension_numbers = #tpu.dot_dimension_numbers<[1], [0], [0], [1], [0, 0, 1, 1], [], []>} : vector<1x32xf32>, vector<32x2xf32>, vector<1x2xf32> -> vector<1x2xf32>
    %c0_5 = arith.constant 0 : index
    %c0_6 = arith.constant 0 : index
    %4 = vector.load %arg3[%c0_5, %c0_6] : memref<1x2xf32, #tpu.memory_space<vmem>>, vector<1x2xf32>
    %5 = arith.addf %3, %4 : vector<1x2xf32>
    %cst_7 = arith.constant 0.000000e+00 : f32
    %6 = vector.broadcast %cst_7 : f32 to vector<1x2xf32>
    %7 = arith.maximumf %5, %6 : vector<1x2xf32>
    %c0_8 = arith.constant 0 : index
    %c0_9 = arith.constant 0 : index
    %8 = vector.load %arg4[%c0_8, %c0_9] : memref<2x32xf32, #tpu.memory_space<vmem>>, vector<2x32xf32>
    %cst_10 = arith.constant dense<0.000000e+00> : vector<1x32xf32>
    %9 = tpu.matmul %7, %8, %cst_10 {dimension_numbers = #tpu.dot_dimension_numbers<[1], [0], [0], [1], [0, 0, 1, 1], [], []>} : vector<1x2xf32>, vector<2x32xf32>, vector<1x32xf32> -> vector<1x32xf32>
    %c0_11 = arith.constant 0 : index
    %c0_12 = arith.constant 0 : index
    %10 = vector.load %arg5[%c0_11, %c0_12] : memref<1x32xf32, #tpu.memory_space<vmem>>, vector<1x32xf32>
    %11 = arith.addf %9, %10 : vector<1x32xf32>
    %12 = arith.negf %11 : vector<1x32xf32>
    %13 = math.exp %12 : vector<1x32xf32>
    %cst_13 = arith.constant 1.000000e+00 : f32
    %14 = vector.broadcast %cst_13 : f32 to vector<1x32xf32>
    %15 = arith.addf %14, %13 : vector<1x32xf32>
    %16 = arith.divf %14, %15 : vector<1x32xf32>
    %17 = vector.shape_cast %16 : vector<1x32xf32> to vector<1x32x1xf32>
    %18 = vector.broadcast %17 : vector<1x32x1xf32> to vector<1x32x256xf32>
    %19 = arith.mulf %0, %18 : vector<1x32x256xf32>
    %c0_14 = arith.constant 0 : index
    %c0_15 = arith.constant 0 : index
    %c0_16 = arith.constant 0 : index
    %20 = vector.load %arg6[%c0_14, %c0_15, %c0_16] : memref<1x32x256xf32, #tpu.memory_space<vmem>>, vector<1x32x256xf32>
    tpu.vector_store %arg6[%c0_14, %c0_15, %c0_16], %19 {strides = array<i32>} : memref<1x32x256xf32, #tpu.memory_space<vmem>>, vector<1x32x256xf32>,
    return
  }
  func.func @transform_0(%arg0: i32) -> (i32, i32, i32) {
    %c0_i32 = arith.constant 0 : i32
    %c0_i32_0 = arith.constant 0 : i32
    %c0_i32_1 = arith.constant 0 : i32
    return %arg0, %c0_i32, %c0_i32_0 : i32, i32, i32
  }
  func.func @transform_1(%arg0: i32) -> (i32, i32) {
    %c0_i32 = arith.constant 0 : i32
    %c0_i32_0 = arith.constant 0 : i32
    %c0_i32_1 = arith.constant 0 : i32
    return %c0_i32, %c0_i32_0 : i32, i32
  }
  func.func @transform_2(%arg0: i32) -> (i32, i32) {
    %c0_i32 = arith.constant 0 : i32
    %c0_i32_0 = arith.constant 0 : i32
    %c0_i32_1 = arith.constant 0 : i32
    return %c0_i32, %c0_i32_0 : i32, i32
  }
  func.func @transform_3(%arg0: i32) -> (i32, i32) {
    %c0_i32 = arith.constant 0 : i32
    %c0_i32_0 = arith.constant 0 : i32
    %c0_i32_1 = arith.constant 0 : i32
    return %c0_i32, %c0_i32_0 : i32, i32
  }
  func.func @transform_4(%arg0: i32) -> (i32, i32) {
    %c0_i32 = arith.constant 0 : i32
    %c0_i32_0 = arith.constant 0 : i32
    %c0_i32_1 = arith.constant 0 : i32
    return %c0_i32, %c0_i32_0 : i32, i32
  }
  func.func @transform_5(%arg0: i32) -> (i32, i32, i32) {
    %c0_i32 = arith.constant 0 : i32
    %c0_i32_0 = arith.constant 0 : i32
    %c0_i32_1 = arith.constant 0 : i32
    return %arg0, %c0_i32, %c0_i32_0 : i32, i32, i32
  }
}

</mosaic_0001>

<llo_original>
// kernel: se_layer.1
$region0: #{se_layer.1}
  #allocation0 [shape = 'u32[]', space=smem, size = 0x4, offset = 0x4, fixed_abs, tag = 'smem constant byte address 0x4 - core index']
  #allocation1 [shape = 'u32[144,128]{1,0:T(1,128)}', space=vmem, size = 0x12000, scoped, tag = 'internal scratch']
  %s0 = inlined_call_operand.vmem [shape: f32[2,32,256], index: 0, kind: input, shape index: {}]
  %s1 = inlined_call_operand.vmem [shape: f32[32,2], index: 1, kind: input, shape index: {}]
  %s2 = inlined_call_operand.vmem [shape: f32[1,2], index: 2, kind: input, shape index: {}]
  %s3 = inlined_call_operand.vmem [shape: f32[2,32], index: 3, kind: input, shape index: {}]
  %s4 = inlined_call_operand.vmem [shape: f32[1,32], index: 4, kind: input, shape index: {}]
  %s5 = inlined_call_operand.vmem [shape: f32[2,32,256], index: 5, kind: output, shape index: {}]
  %s6 = sld [smem:[#allocation0]]
  $region53: #{se_layer.1} parent=0
    _
  %s8 = ssub.s32 1, %s6
  %s9 = scalar_select 0, %s8, %s6
  loop: start=0, step=1, limit=4
  $region2: #{se_layer.1} parent=0 // loop_pre_header
    _
  $region3: #{se_layer.1} parent=0 // loop_header
    %s11 = sphi 0, %s15
    %p12 = scmp.ge.s32.totalorder %s11, 4
    %s21 = sphi 0, %s23
    %s24 = sphi 0, %s21
    %s25 = sphi 0, %s24
    %s41 = sphi 0, %s25
    %s45 = sphi 0, %s45
    %s47 = sphi 0, %s45
    %s48 = sphi 0, %s47
    %s62 = sphi 0, %s48
    %s66 = sphi 0, %s66
    %s68 = sphi 0, %s66
    %s69 = sphi 0, %s68
    %s83 = sphi 0, %s69
    %s87 = sphi 0, %s87
    %s89 = sphi 0, %s87
    %s90 = sphi 0, %s89
    %s104 = sphi 0, %s90
    %s108 = sphi 0, %s108
    %s110 = sphi 0, %s108
    %s111 = sphi 0, %s110
    %s125 = sphi 0, %s111
    %s131 = sphi 0, %s133
    %s134 = sphi 0, %s131
    %s135 = sphi 0, %s134
    %s151 = sphi 0, %s135
  $region4: #{se_layer.1} parent=0 // loop_header_branch
    %14 = sbr.rel (%p12) target = $region8
  $region5: #{se_layer.1} parent=0 // loop_body
    %s16 = ssub.s32 %s11, 1
    %s17 = ssub.s32 %s11, 2
    %s18 = sadd.s32 %s11, 1
    %s19 = ssub.s32 %s11, %s18
    %p20 = scmp.eq.s32.totalorder %s19, 0
    %s22 = sadd.s32 %s21, 1
    %s23 = scalar_select %p20, %s21, %s22
    %p26 = pneg %p20
    %p27 = scmp.eq.s32.totalorder %s11, 1
    %p28 = por %p26, %p27
    %p29 = scmp.ne.s32.totalorder %s21, %s24
    %p30 = scmp.eq.s32.totalorder %s11, 0
    %p31 = por %p29, %p30
    %p32 = scmp.ne.s32.totalorder %s21, %s24
    %p33 = scmp.eq.s32.totalorder %s16, 1
    %p34 = por %p32, %p33
    %p35 = scmp.ne.s32.totalorder %s24, %s25
    %p36 = scmp.eq.s32.totalorder %s16, 0
    %p37 = por %p35, %p36
    %p38 = scmp.ne.s32.totalorder %s24, %s25
    %p39 = scmp.eq.s32.totalorder %s17, 1
    %p40 = por %p38, %p39
    %p42 = scmp.ne.s32.totalorder %s25, %s41
    %p43 = scmp.eq.s32.totalorder %s17, 0
    %p44 = por %p42, %p43
    %s46 = sadd.s32 %s45, 1
    %p49 = scmp.eq.s32.totalorder %s11, 1
    %p50 = scmp.ne.s32.totalorder %s45, %s47
    %p51 = scmp.eq.s32.totalorder %s11, 0
    %p52 = por %p50, %p51
    %p53 = scmp.ne.s32.totalorder %s45, %s47
    %p54 = scmp.eq.s32.totalorder %s16, 1
    %p55 = por %p53, %p54
    %p56 = scmp.ne.s32.totalorder %s47, %s48
    %p57 = scmp.eq.s32.totalorder %s16, 0
    %p58 = por %p56, %p57
    %p59 = scmp.ne.s32.totalorder %s47, %s48
    %p60 = scmp.eq.s32.totalorder %s17, 1
    %p61 = por %p59, %p60
    %p63 = scmp.ne.s32.totalorder %s48, %s62
    %p64 = scmp.eq.s32.totalorder %s17, 0
    %p65 = por %p63, %p64
    %s67 = sadd.s32 %s66, 1
    %p70 = scmp.eq.s32.totalorder %s11, 1
    %p71 = scmp.ne.s32.totalorder %s66, %s68
    %p72 = scmp.eq.s32.totalorder %s11, 0
    %p73 = por %p71, %p72
    %p74 = scmp.ne.s32.totalorder %s66, %s68
    %p75 = scmp.eq.s32.totalorder %s16, 1
    %p76 = por %p74, %p75
    %p77 = scmp.ne.s32.totalorder %s68, %s69
    %p78 = scmp.eq.s32.totalorder %s16, 0
    %p79 = por %p77, %p78
    %p80 = scmp.ne.s32.totalorder %s68, %s69
    %p81 = scmp.eq.s32.totalorder %s17, 1
    %p82 = por %p80, %p81
    %p84 = scmp.ne.s32.totalorder %s69, %s83
    %p85 = scmp.eq.s32.totalorder %s17, 0
    %p86 = por %p84, %p85
    %s88 = sadd.s32 %s87, 1
    %p91 = scmp.eq.s32.totalorder %s11, 1
    %p92 = scmp.ne.s32.totalorder %s87, %s89
    %p93 = scmp.eq.s32.totalorder %s11, 0
    %p94 = por %p92, %p93
    %p95 = scmp.ne.s32.totalorder %s87, %s89
    %p96 = scmp.eq.s32.totalorder %s16, 1
    %p97 = por %p95, %p96
    %p98 = scmp.ne.s32.totalorder %s89, %s90
    %p99 = scmp.eq.s32.totalorder %s16, 0
    %p100 = por %p98, %p99
    %p101 = scmp.ne.s32.totalorder %s89, %s90
    %p102 = scmp.eq.s32.totalorder %s17, 1
    %p103 = por %p101, %p102
    %p105 = scmp.ne.s32.totalorder %s90, %s104
    %p106 = scmp.eq.s32.totalorder %s17, 0
    %p107 = por %p105, %p106
    %s109 = sadd.s32 %s108, 1
    %p112 = scmp.eq.s32.totalorder %s11, 1
    %p113 = scmp.ne.s32.totalorder %s108, %s110
    %p114 = scmp.eq.s32.totalorder %s11, 0
    %p115 = por %p113, %p114
    %p116 = scmp.ne.s32.totalorder %s108, %s110
    %p117 = scmp.eq.s32.totalorder %s16, 1
    %p118 = por %p116, %p117
    %p119 = scmp.ne.s32.totalorder %s110, %s111
    %p120 = scmp.eq.s32.totalorder %s16, 0
    %p121 = por %p119, %p120
    %p122 = scmp.ne.s32.totalorder %s110, %s111
    %p123 = scmp.eq.s32.totalorder %s17, 1
    %p124 = por %p122, %p123
    %p126 = scmp.ne.s32.totalorder %s111, %s125
    %p127 = scmp.eq.s32.totalorder %s17, 0
    %p128 = por %p126, %p127
    %s129 = ssub.s32 %s11, %s18
    %p130 = scmp.eq.s32.totalorder %s129, 0
    %s132 = sadd.s32 %s131, 1
    %s133 = scalar_select %p130, %s131, %s132
    %p136 = pneg %p130
    %p137 = scmp.eq.s32.totalorder %s11, 1
    %p138 = por %p136, %p137
    %p139 = scmp.ne.s32.totalorder %s131, %s134
    %p140 = scmp.eq.s32.totalorder %s11, 0
    %p141 = por %p139, %p140
    %p142 = scmp.ne.s32.totalorder %s131, %s134
    %p143 = scmp.eq.s32.totalorder %s16, 1
    %p144 = por %p142, %p143
    %p145 = scmp.ne.s32.totalorder %s134, %s135
    %p146 = scmp.eq.s32.totalorder %s16, 0
    %p147 = por %p145, %p146
    %p148 = scmp.ne.s32.totalorder %s134, %s135
    %p149 = scmp.eq.s32.totalorder %s17, 1
    %p150 = por %p148, %p149
    %p152 = scmp.ne.s32.totalorder %s135, %s151
    %p153 = scmp.eq.s32.totalorder %s17, 0
    %p154 = por %p152, %p153
    %p155 = scmp.le.s32.totalorder 1, %s11
    %p156 = scmp.lt.s32.totalorder %s11, 3
    %p157 = pnand %p155, %p156
    %p158 = pneg %p157
    // Predicated region
    $region9: #{se_layer.1} parent=5 // pred_check
      _
    $region10: #{se_layer.1} parent=5 // pred_check_branch
      %160 = sbr.rel (%p157) target = $region12
    $region11: #{se_layer.1} parent=5 // pred_region
      %s161 = ssub.s32 %s11, 1
      // Predicated region
      $region13: #{se_layer.1} parent=11 // pred_check
        %p162 = pneg %p58
      $region14: #{se_layer.1} parent=11 // pred_check_branch
        %164 = sbr.rel (%p162) target = $region16
      $region15: #{se_layer.1} parent=11 // pred_region
        _
      $region16: #{se_layer.1} parent=11 // pred_fallthru
        _
      // Predicated region
      $region17: #{se_layer.1} parent=11 // pred_check
        %p165 = pneg %p79
      $region18: #{se_layer.1} parent=11 // pred_check_branch
        %167 = sbr.rel (%p165) target = $region20
      $region19: #{se_layer.1} parent=11 // pred_region
        _
      $region20: #{se_layer.1} parent=11 // pred_fallthru
        _
      // Predicated region
      $region21: #{se_layer.1} parent=11 // pred_check
        %p168 = pneg %p100
      $region22: #{se_layer.1} parent=11 // pred_check_branch
        %170 = sbr.rel (%p168) target = $region24
      $region23: #{se_layer.1} parent=11 // pred_region
        _
      $region24: #{se_layer.1} parent=11 // pred_fallthru
        _
      // Predicated region
      $region25: #{se_layer.1} parent=11 // pred_check
        %p171 = pneg %p121
      $region26: #{se_layer.1} parent=11 // pred_check_branch
        %173 = sbr.rel (%p171) target = $region28
      $region27: #{se_layer.1} parent=11 // pred_region
        _
      $region28: #{se_layer.1} parent=11 // pred_fallthru
        _
    $region12: #{se_layer.1} parent=5 // pred_fallthru
      _
    %p174 = scmp.lt.s32.totalorder %s11, 2
    // Predicated region
    $region29: #{se_layer.1} parent=5 // pred_check
      %p175 = pneg %p174
    $region30: #{se_layer.1} parent=5 // pred_check_branch
      %177 = sbr.rel (%p175) target = $region32
    $region31: #{se_layer.1} parent=5 // pred_region
      // Predicated region
      $region33: #{se_layer.1} parent=31 // pred_check
        %p178 = pneg %p31
      $region34: #{se_layer.1} parent=31 // pred_check_branch
        %180 = sbr.rel (%p178) target = $region36
      $region35: #{se_layer.1} parent=31 // pred_region
        %p181 = scmp.lt.s32.totalorder %s11, 1
        %s182 = scalar_select %p181, %s11, 1
        %s183 = smul.addr %s182, 8
        %s184 = smul.addr %s183, 8
        %s185 = scalar_lea.vmem %s0, %s184
      $region36: #{se_layer.1} parent=31 // pred_fallthru
        _
    $region32: #{se_layer.1} parent=5 // pred_fallthru
      _
    %p186 = scmp.le.s32.totalorder 1, %s11
    %p187 = scmp.lt.s32.totalorder %s11, 3
    %p188 = pnand %p186, %p187
    %p189 = pneg %p188
    // Predicated region
    $region37: #{se_layer.1} parent=5 // pred_check
      _
    $region38: #{se_layer.1} parent=5 // pred_check_branch
      %191 = sbr.rel (%p188) target = $region40
    $region39: #{se_layer.1} parent=5 // pred_region
      %s192 = ssub.s32 %s11, 1
      %p193 = scmp.lt.s32.totalorder %s16, 1
      %s194 = scalar_select %p193, %s16, 1
      %s195 = smul.addr %s194, 8
      %s196 = smul.addr %s195, 8
      %s197 = scalar_lea.vmem %s0, %s196
      %p198 = pneg %p37
      %p199 = pneg %p34
      %p200 = pneg %p58
      %p201 = pneg %p55
      %p202 = pneg %p79
      %p203 = pneg %p76
      %p204 = pneg %p100
      %p205 = pneg %p97
      %p206 = pneg %p121
      %p207 = pneg %p118
      %p208 = pneg %p147
      %p209 = pneg %p144
      %p210 = scmp.lt.s32.totalorder %s16, 1
      %s211 = scalar_select %p210, %s16, 1
      %s212 = smul.addr %s211, 8
      %s213 = smul.addr %s212, 8
      %s214 = scalar_lea.vmem %s5, %s213
      %p215 = scmp.lt.s32.totalorder %s16, 1
      %s216 = scalar_select %p215, %s16, 1
      %s217 = smul.addr %s216, 8
      %s218 = smul.addr %s217, 8
      %s219 = scalar_lea.vmem %s0, %s218
      %p220 = scmp.lt.s32.totalorder %s16, 1
      %s221 = scalar_select %p220, %s16, 1
      %s222 = smul.addr %s221, 8
      %s223 = smul.addr %s222, 8
      %s224 = scalar_lea.vmem %s5, %s223
      %v225 = vld [vmem:[%s219] sm:$0xff]
      %v226 = vld [vmem:[%s219 + $0x8] sm:$0xff]
      %v227 = vld [vmem:[%s219 + $0x10] sm:$0xff]
      %v228 = vld [vmem:[%s219 + $0x18] sm:$0xff]
      %v229 = vld [vmem:[%s219 + $0x20] sm:$0xff]
      %v230 = vld [vmem:[%s219 + $0x28] sm:$0xff]
      %v231 = vld [vmem:[%s219 + $0x30] sm:$0xff]
      %v232 = vld [vmem:[%s219 + $0x38] sm:$0xff]
      %v233 = vadd.f32 %v225, %v226
      %234 = vadd.xlane.f32.xlu0 %v233
      %v235 = vpop.xlane.xlu0 %234
      %v236 = vadd.f32 %v227, %v228
      %237 = vadd.xlane.f32.xlu0 %v236
      %v238 = vpop.xlane.xlu0 %237
      %v239 = vadd.f32 %v229, %v230
      %240 = vadd.xlane.f32.xlu0 %v239
      %v241 = vpop.xlane.xlu0 %240
      %v242 = vadd.f32 %v231, %v232
      %243 = vadd.xlane.f32.xlu0 %v242
      %v244 = vpop.xlane.xlu0 %243
      %v245 = vld [vmem:[%s1] sm:$0xff]
      %v246 = vld [vmem:[%s1 + $0x8] sm:$0xff]
      %v247 = vld [vmem:[%s1 + $0x10] sm:$0xff]
      %v248 = vld [vmem:[%s1 + $0x18] sm:$0xff]
      %v249 = vld [vmem:[%s2] sm:$0x1]
      %v254 = vlaneseq
      %v255 = vand.u32 %v254, 127
      %v256 = vlaneseq
      %v257 = vshrl.u32 %v256, 7
      %v258 = vsub.s32 %v255, %v257
      %v259 = vrot.slane %v235, %v258
      %v260 = vadd.s32 %v255, 4294967288
      %v261 = vlaneseq
      %v262 = vshrl.u32 %v261, 7
      %v263 = vsub.s32 %v260, %v262
      %v264 = vrot.slane %v238, %v263
      %vm265 = vcmask 130112
      %v266 = vsel %vm265, %v264, %v259
      %v267 = vadd.s32 %v255, 4294967280
      %v268 = vlaneseq
      %v269 = vshrl.u32 %v268, 7
      %v270 = vsub.s32 %v267, %v269
      %v271 = vrot.slane %v241, %v270
      %vm272 = vcmask 195712
      %v273 = vsel %vm272, %v271, %v266
      %v274 = vadd.s32 %v255, 4294967272
      %v275 = vlaneseq
      %v276 = vshrl.u32 %v275, 7
      %v277 = vsub.s32 %v274, %v276
      %v278 = vrot.slane %v244, %v277
      %vm279 = vcmask 261312
      %v280 = vsel %vm279, %v278, %v273
      %vm281 = vcmask 261120
      %v282 = vsel %vm281, %v280, 0
      %284 = vmatprep.subr.mxu0 0.0
      %285 = vmatpush1.msra.mxu0 %v245
      %286 = vmatprep.subr.mxu0 0.0
      %287 = vmatpush1.msra.mxu0 %v246
      %288 = vmatprep.subr.mxu0 0.0
      %289 = vmatpush1.msra.mxu0 %v247
      %290 = vmatprep.subr.mxu0 0.0
      %291 = vmatpush1.msra.mxu0 %v248
      %292 = vmatprep.subr.mxu0 0.0
      %293 = vmatpush1.msra.mxu0 0.0
      %294 = vmatprep.subr.mxu0 0.0
      %295 = vmatpush1.msra.mxu0 0.0
      %296 = vmatprep.subr.mxu0 0.0
      %297 = vmatpush1.msra.mxu0 0.0
      %298 = vmatprep.subr.mxu0 0.0
      %299 = vmatpush1.msra.mxu0 0.0
      %300 = vmatprep.subr.mxu0 0.0
      %301 = vmatpush1.msra.mxu0 0.0
      %302 = vmatprep.subr.mxu0 0.0
      %303 = vmatpush1.msra.mxu0 0.0
      %304 = vmatprep.subr.mxu0 0.0
      %305 = vmatpush1.msra.mxu0 0.0
      %306 = vmatprep.subr.mxu0 0.0
      %307 = vmatpush1.msra.mxu0 0.0
      %308 = vmatprep.subr.mxu0 0.0
      %309 = vmatpush1.msra.mxu0 0.0
      %310 = vmatprep.subr.mxu0 0.0
      %311 = vmatpush1.msra.mxu0 0.0
      %312 = vmatprep.subr.mxu0 0.0
      %313 = vmatpush1.msra.mxu0 0.0
      %314 = vmatprep.subr.mxu0 0.0
      %315 = vmatpush1.msra.mxu0 0.0
      %316 = vmatprep.subr.mxu0 0.0
      %317 = vmatpush1.msra.mxu0 0.0
      %318 = vmatprep.subr.mxu0 0.0
      %319 = vmatpush1.msra.mxu0 0.0
      %320 = vmatprep.subr.mxu0 0.0
      %321 = vmatpush1.msra.mxu0 0.0
      %322 = vmatprep.subr.mxu0 0.0
      %323 = vmatpush1.msra.mxu0 0.0
      %324 = vmatprep.subr.mxu0 0.0
      %325 = vmatpush1.msra.mxu0 0.0
      %326 = vmatprep.subr.mxu0 0.0
      %327 = vmatpush1.msra.mxu0 0.0
      %328 = vmatprep.subr.mxu0 0.0
      %329 = vmatpush1.msra.mxu0 0.0
      %330 = vmatprep.subr.mxu0 0.0
      %331 = vmatpush1.msra.mxu0 0.0
      %332 = vmatprep.subr.mxu0 0.0
      %333 = vmatpush1.msra.mxu0 0.0
      %334 = vmatprep.subr.mxu0 0.0
      %335 = vmatpush1.msra.mxu0 0.0
      %336 = vmatprep.subr.mxu0 0.0
      %337 = vmatpush1.msra.mxu0 0.0
      %338 = vmatprep.subr.mxu0 0.0
      %339 = vmatpush1.msra.mxu0 0.0
      %340 = vmatprep.subr.mxu0 0.0
      %341 = vmatpush1.msra.mxu0 0.0
      %342 = vmatprep.subr.mxu0 0.0
      %343 = vmatpush1.msra.mxu0 0.0
      %344 = vmatprep.subr.mxu0 0.0
      %345 = vmatpush1.msra.mxu0 0.0
      %346 = vmatprep.subr.mxu0 0.0
      %347 = vmatpush1.msra.mxu0 0.0
      %348 = vmatprep.mubr.f32.mxu0 0.0
      %349 = vmatmul.mubr.f32.gmra.mrb[0].mxu0 %v282
      %v350 = vpop.f32.mrb[0].mxu0
      %v351 = vadd.f32 %v249, %v350
      %v352 = vpop.f32.mrb[0].mxu0
      %353 = vdwg.mxu0
      %v354 = vmax.f32 %v351, 0.0
      %v355 = vld [vmem:[%s3] sm:$0x3]
      %v356 = vld [vmem:[%s4] sm:$0x1]
      %vm357 = vcmask 15360
      %v359 = vsel %vm357, %v354, 0
      %vm361 = vcmask 1041408
      %v363 = vsel %vm361, %v355, 0
      %365 = vmatprep.subr.mxu0 0.0
      %366 = vmatpush1.msra.mxu0 %v363
      %367 = vmatprep.subr.mxu0 0.0
      %368 = vmatpush1.msra.mxu0 0.0
      %369 = vmatprep.subr.mxu0 0.0
      %370 = vmatpush1.msra.mxu0 0.0
      %371 = vmatprep.subr.mxu0 0.0
      %372 = vmatpush1.msra.mxu0 0.0
      %373 = vmatprep.subr.mxu0 0.0
      %374 = vmatpush1.msra.mxu0 0.0
      %375 = vmatprep.subr.mxu0 0.0
      %376 = vmatpush1.msra.mxu0 0.0
      %377 = vmatprep.subr.mxu0 0.0
      %378 = vmatpush1.msra.mxu0 0.0
      %379 = vmatprep.subr.mxu0 0.0
      %380 = vmatpush1.msra.mxu0 0.0
      %381 = vmatprep.subr.mxu0 0.0
      %382 = vmatpush1.msra.mxu0 0.0
      %383 = vmatprep.subr.mxu0 0.0
      %384 = vmatpush1.msra.mxu0 0.0
      %385 = vmatprep.subr.mxu0 0.0
      %386 = vmatpush1.msra.mxu0 0.0
      %387 = vmatprep.subr.mxu0 0.0
      %388 = vmatpush1.msra.mxu0 0.0
      %389 = vmatprep.subr.mxu0 0.0
      %390 = vmatpush1.msra.mxu0 0.0
      %391 = vmatprep.subr.mxu0 0.0
      %392 = vmatpush1.msra.mxu0 0.0
      %393 = vmatprep.subr.mxu0 0.0
      %394 = vmatpush1.msra.mxu0 0.0
      %395 = vmatprep.subr.mxu0 0.0
      %396 = vmatpush1.msra.mxu0 0.0
      %397 = vmatprep.subr.mxu0 0.0
      %398 = vmatpush1.msra.mxu0 0.0
      %399 = vmatprep.subr.mxu0 0.0
      %400 = vmatpush1.msra.mxu0 0.0
      %401 = vmatprep.subr.mxu0 0.0
      %402 = vmatpush1.msra.mxu0 0.0
      %403 = vmatprep.subr.mxu0 0.0
      %404 = vmatpush1.msra.mxu0 0.0
      %405 = vmatprep.subr.mxu0 0.0
      %406 = vmatpush1.msra.mxu0 0.0
      %407 = vmatprep.subr.mxu0 0.0
      %408 = vmatpush1.msra.mxu0 0.0
      %409 = vmatprep.subr.mxu0 0.0
      %410 = vmatpush1.msra.mxu0 0.0
      %411 = vmatprep.subr.mxu0 0.0
      %412 = vmatpush1.msra.mxu0 0.0
      %413 = vmatprep.subr.mxu0 0.0
      %414 = vmatpush1.msra.mxu0 0.0
      %415 = vmatprep.subr.mxu0 0.0
      %416 = vmatpush1.msra.mxu0 0.0
      %417 = vmatprep.subr.mxu0 0.0
      %418 = vmatpush1.msra.mxu0 0.0
      %419 = vmatprep.subr.mxu0 0.0
      %420 = vmatpush1.msra.mxu0 0.0
      %421 = vmatprep.subr.mxu0 0.0
      %422 = vmatpush1.msra.mxu0 0.0
      %423 = vmatprep.subr.mxu0 0.0
      %424 = vmatpush1.msra.mxu0 0.0
      %425 = vmatprep.subr.mxu0 0.0
      %426 = vmatpush1.msra.mxu0 0.0
      %427 = vmatprep.subr.mxu0 0.0
      %428 = vmatpush1.msra.mxu0 0.0
      %429 = vmatprep.mubr.f32.mxu0 0.0
      %430 = vmatmul.mubr.f32.gmra.mrb[0].mxu0 %v359
      %v431 = vpop.f32.mrb[0].mxu0
      %v432 = vadd.f32 %v356, %v431
      %v433 = vpop.f32.mrb[0].mxu0
      %434 = vdwg.mxu0
      %v435 = vxor.u32 %v432, 2147483648
      %v436 = vmul.f32 %v435, 1.442695
      %v437 = vpow.pop %v436
      %v438 = vadd.f32 %v437, 1.0
      %v439 = vrcp.pop %v438
      %v440 = vmul.f32 1.0, %v439
      %v441 = vlaneseq
      %v442 = vshrl.u32 %v441, 7
      %v443 = vsub.s32 0, %v442
      %v444 = vrot.slane %v440, %v443
      %446 = vbcast.lane.b32.xlu0 %v444, 256
      %v447 = vpop.permute.xlu0 %446
      %s449 = sor.u32 256, 8
      %450 = vbcast.lane.b32.xlu0 %v444, %s449
      %v451 = vpop.permute.xlu0 %450
      %s453 = sor.u32 256, 16
      %454 = vbcast.lane.b32.xlu0 %v444, %s453
      %v455 = vpop.permute.xlu0 %454
      %s457 = sor.u32 256, 24
      %458 = vbcast.lane.b32.xlu0 %v444, %s457
      %v459 = vpop.permute.xlu0 %458
      %v460 = vmul.f32 %v225, %v447
      %v461 = vmul.f32 %v226, %v447
      %v462 = vmul.f32 %v227, %v451
      %v463 = vmul.f32 %v228, %v451
      %v464 = vmul.f32 %v229, %v455
      %v465 = vmul.f32 %v230, %v455
      %v466 = vmul.f32 %v231, %v459
      %v467 = vmul.f32 %v232, %v459
      %468 = vst [vmem:[%s224] sm:$0xff] %v460
      %469 = vst [vmem:[%s224 + $0x8] sm:$0xff] %v461
      %470 = vst [vmem:[%s224 + $0x10] sm:$0xff] %v462
      %471 = vst [vmem:[%s224 + $0x18] sm:$0xff] %v463
      %472 = vst [vmem:[%s224 + $0x20] sm:$0xff] %v464
      %473 = vst [vmem:[%s224 + $0x28] sm:$0xff] %v465
      %474 = vst [vmem:[%s224 + $0x30] sm:$0xff] %v466
      %475 = vst [vmem:[%s224 + $0x38] sm:$0xff] %v467
      %p476 = scmp.lt.s32.totalorder %s16, 1
      %s477 = scalar_select %p476, %s16, 1
      %s478 = smul.addr %s477, 8
      %s479 = smul.addr %s478, 8
      %s480 = scalar_lea.vmem %s5, %s479
      // Predicated region
      $region41: #{se_layer.1} parent=39 // pred_check
        %p481 = pneg %p144
      $region42: #{se_layer.1} parent=39 // pred_check_branch
        %483 = sbr.rel (%p481) target = $region44
      $region43: #{se_layer.1} parent=39 // pred_region
        _
      $region44: #{se_layer.1} parent=39 // pred_fallthru
        _
    $region40: #{se_layer.1} parent=5 // pred_fallthru
      _
    %p484 = scmp.le.s32.totalorder 2, %s11
    // Predicated region
    $region45: #{se_layer.1} parent=5 // pred_check
      %p485 = pneg %p484
    $region46: #{se_layer.1} parent=5 // pred_check_branch
      %487 = sbr.rel (%p485) target = $region48
    $region47: #{se_layer.1} parent=5 // pred_region
      %s488 = ssub.s32 %s11, 2
      // Predicated region
      $region49: #{se_layer.1} parent=47 // pred_check
        %p489 = pneg %p150
      $region50: #{se_layer.1} parent=47 // pred_check_branch
        %491 = sbr.rel (%p489) target = $region52
      $region51: #{se_layer.1} parent=47 // pred_region
        %p492 = scmp.lt.s32.totalorder %s17, 1
        %s493 = scalar_select %p492, %s17, 1
        %s494 = smul.addr %s493, 8
        %s495 = smul.addr %s494, 8
        %s496 = scalar_lea.vmem %s5, %s495
      $region52: #{se_layer.1} parent=47 // pred_fallthru
        _
    $region48: #{se_layer.1} parent=5 // pred_fallthru
      _
  $region6: #{se_layer.1} parent=0 // loop_footer
    %s15 = sadd.s32 1, %s11
  $region7: #{se_layer.1} parent=0 // loop_footer_branch
    %10 = sbr.rel target = $region3
  $region8: #{se_layer.1} parent=0 // loop_exit
    _

</llo_original>
